<compile_context>
chip_gen: v5e
topology: v5e:2x2
jax: 0.10.0
libtpu: 0.0.40
codegen_flags: <defaults>
</compile_context>

<pallas_src>
import jax
import jax.numpy as jnp
from jax.experimental import pallas as pl
from jax.experimental.pallas import tpu as pltpu


def _loss_grad_kernel(c_ref, img_ref, tgt_ref, grad_ref):
    # grad of (sum((img - target)^2) * scale) w.r.t. img, with c = 2 * scale.
    grad_ref[...] = c_ref[0] * (img_ref[...] - tgt_ref[...])


# ~2 MiB per array per tile: 3 arrays x 2 pipeline buffers ~ 12 MiB VMEM,
# safe on v5e (16 MiB default scoped), v6e (32 MiB), v7x (64 MiB physical).
_TARGET_TILE_BYTES = 2 * 1024 * 1024


def _choose_layout(n, itemsize):
    """Pick a lane-dense (rows, lanes) slab + row-tile size for n elements."""
    lanes = 128
    for cand in (4096, 2048, 1024, 512, 256, 128):
        if n % cand == 0:
            lanes = cand
            break
    main_n = (n // lanes) * lanes          # elements handled by the kernel
    rows = main_n // lanes
    # rows per tile: ~_TARGET_TILE_BYTES per array, multiple of 8 sublanes
    tr = max(8, (_TARGET_TILE_BYTES // (lanes * itemsize)) // 8 * 8)
    if tr >= rows:
        tr = rows                          # single block, full sublane extent
    return lanes, rows, main_n, tr


def loss_grads(img, target, scale=1.0):
    """Pallas implementation of LossGrads.forward with an MSE-sum loss_fn.

    img, target: float arrays of identical shape (e.g. NCHW).
    Returns grad = 2 * scale * (img - target), same shape/dtype as img.
    """
    assert img.shape == target.shape and img.dtype == target.dtype
    orig_shape = img.shape
    dtype = img.dtype
    n = img.size

    # Fold 2*scale into one scalar (single SMEM word, read once per tile).
    c = jnp.asarray([2.0 * scale], dtype=dtype)

    img_flat = img.reshape(-1)
    tgt_flat = target.reshape(-1)

    lanes, rows, main_n, tr = _choose_layout(n, jnp.dtype(dtype).itemsize)

    parts = []
    if main_n:
        img2d = img_flat[:main_n].reshape(rows, lanes)
        tgt2d = tgt_flat[:main_n].reshape(rows, lanes)
        grid = (pl.cdiv(rows, tr),)

        grad2d = pl.pallas_call(
            _loss_grad_kernel,
            out_shape=jax.ShapeDtypeStruct((rows, lanes), dtype),
            grid_spec=pltpu.PrefetchScalarGridSpec(
                num_scalar_prefetch=0,
                grid=grid,
                in_specs=[
                    pl.BlockSpec(memory_space=pltpu.SMEM),          # c = 2*scale
                    pl.BlockSpec((tr, lanes), lambda i: (i, 0)),    # img tile
                    pl.BlockSpec((tr, lanes), lambda i: (i, 0)),    # target tile
                ],
                out_specs=pl.BlockSpec((tr, lanes), lambda i: (i, 0)),
            ),
            compiler_params=pltpu.CompilerParams(
                dimension_semantics=("parallel",),
            ),
        )(c, img2d, tgt2d)
        parts.append(grad2d.reshape(-1))

    if main_n < n:
        # Tiny ragged tail (< 128 elements): plain-JAX epilogue, no padding copies.
        parts.append(c[0] * (img_flat[main_n:] - tgt_flat[main_n:]))

    grad_flat = parts[0] if len(parts) == 1 else jnp.concatenate(parts)
    return grad_flat.reshape(orig_shape)


if __name__ == "__main__":
    key = jax.random.PRNGKey(0)
    k_img, k_tgt, k_img2, k_tgt2, k_img3, k_tgt3 = jax.random.split(key, 6)

    def check(img, target, scale):
        grad = loss_grads(img, target, scale=scale)
        jax.block_until_ready(grad)

        def loss_fn(x):
            return jnp.sum((x - target) ** 2) * scale

        ref = jax.grad(loss_fn)(img)
        assert grad.shape == img.shape and grad.dtype == img.dtype
        assert jnp.allclose(grad, ref, atol=1e-4, rtol=1e-4)

    # Primary: small NCHW shape consistent with the PyTorch module.
    B, C, H, W = 2, 4, 16, 16
    img = jax.random.normal(k_img, (B, C, H, W), dtype=jnp.float32)
    target = jax.random.normal(k_tgt, (B, C, H, W), dtype=jnp.float32)  # loss target
    t = jnp.zeros((B,), dtype=jnp.float32)  # timestep arg (unused, as in torch)
    check(img, target, scale=1.0)

    # Ragged element count (not a multiple of 128) -> kernel + tiny tail path.
    img2 = jax.random.normal(k_img2, (2, 3, 15, 15), dtype=jnp.float32)
    tgt2 = jax.random.normal(k_tgt2, (2, 3, 15, 15), dtype=jnp.float32)
    check(img2, tgt2, scale=0.5)

    # Larger shape exercising the multi-tile, double-buffered grid path.
    img3 = jax.random.normal(k_img3, (4, 4, 256, 256), dtype=jnp.float32)
    tgt3 = jax.random.normal(k_tgt3, (4, 4, 256, 256), dtype=jnp.float32)
    check(img3, tgt3, scale=2.0)

    print("KERNEL_OK")
</pallas_src>

<mosaic_0001>
module attributes {stable_mosaic.version = 11 : i64} {
  func.func @_loss_grad_kernel(%arg0: i32, %arg1: memref<1xf32, #tpu.memory_space<smem>>, %arg2: memref<1x2048xf32, #tpu.memory_space<vmem>>, %arg3: memref<1x2048xf32, #tpu.memory_space<vmem>>, %arg4: memref<1x2048xf32, #tpu.memory_space<vmem>>) attributes {dimension_semantics = [#tpu.dimension_semantics<parallel>], iteration_bounds = array<i64: 1>, scalar_prefetch = 0 : i64, scratch_operands = 0 : i64, tpu.core_type = #tpu.core_type<tc>, window_params = [{transform_indices = @transform_0, window_bounds = array<i64: 1>}, {transform_indices = @transform_1, window_bounds = array<i64: 1, 2048>}, {transform_indices = @transform_2, window_bounds = array<i64: 1, 2048>}, {transform_indices = @transform_3, window_bounds = array<i64: 1, 2048>}]} {
    %c0 = arith.constant 0 : index
    %0 = memref.load %arg1[%c0] : memref<1xf32, #tpu.memory_space<smem>>
    %c0_0 = arith.constant 0 : index
    %c0_1 = arith.constant 0 : index
    %1 = vector.load %arg2[%c0_0, %c0_1] : memref<1x2048xf32, #tpu.memory_space<vmem>>, vector<1x2048xf32>
    %c0_2 = arith.constant 0 : index
    %c0_3 = arith.constant 0 : index
    %2 = vector.load %arg3[%c0_2, %c0_3] : memref<1x2048xf32, #tpu.memory_space<vmem>>, vector<1x2048xf32>
    %3 = arith.subf %1, %2 : vector<1x2048xf32>
    %4 = vector.broadcast %0 : f32 to vector<1x2048xf32>
    %5 = arith.mulf %4, %3 : vector<1x2048xf32>
    %c0_4 = arith.constant 0 : index
    %c0_5 = arith.constant 0 : index
    %6 = vector.load %arg4[%c0_4, %c0_5] : memref<1x2048xf32, #tpu.memory_space<vmem>>, vector<1x2048xf32>
    tpu.vector_store %arg4[%c0_4, %c0_5], %5 {strides = array<i32>} : memref<1x2048xf32, #tpu.memory_space<vmem>>, vector<1x2048xf32>,
    return
  }
  func.func @transform_0(%arg0: i32) -> i32 {
    %c0_i32 = arith.constant 0 : i32
    %c0_i32_0 = arith.constant 0 : i32
    return %c0_i32 : i32
  }
  func.func @transform_1(%arg0: i32) -> (i32, i32) {
    %c0_i32 = arith.constant 0 : i32
    %c0_i32_0 = arith.constant 0 : i32
    return %arg0, %c0_i32 : i32, i32
  }
  func.func @transform_2(%arg0: i32) -> (i32, i32) {
    %c0_i32 = arith.constant 0 : i32
    %c0_i32_0 = arith.constant 0 : i32
    return %arg0, %c0_i32 : i32, i32
  }
  func.func @transform_3(%arg0: i32) -> (i32, i32) {
    %c0_i32 = arith.constant 0 : i32
    %c0_i32_0 = arith.constant 0 : i32
    return %arg0, %c0_i32 : i32, i32
  }
}

</mosaic_0001>

<llo_original>
// kernel: tpu_custom_call.1
$region0: #{tpu_custom_call.1}
  #allocation0 [shape = 'u32[]', space=smem, size = 0x4, offset = 0x4, fixed_abs, tag = 'smem constant byte address 0x4 - core index']
  #allocation1 [shape = 'u32[72,128]{1,0:T(1,128)}', space=vmem, size = 0x9000, scoped, tag = 'internal scratch']
  #allocation2 [shape = 'f32[1]{0:T(128)S(6)}', space=smem, size = 0x200, scoped, tag = 'scoped memory for tpu_custom_call.1']
  %s0 = inlined_call_operand.<no memory space> [shape: f32[1], index: 0, kind: input, shape index: {}]
  %s1 = inlined_call_operand.hbm [shape: f32[1,2048], index: 1, kind: input, shape index: {}]
  %s2 = inlined_call_operand.hbm [shape: f32[1,2048], index: 2, kind: input, shape index: {}]
  %s3 = inlined_call_operand.hbm [shape: f32[1,2048], index: 3, kind: output, shape index: {}]
  %s4 = sld [smem:[#allocation0]]
  $region30: #{tpu_custom_call.1} parent=0
    _
  %s6 = ssub.s32 1, %s4
  %s7 = scalar_select 0, %s6, %s4
  %8 = sst [smem:[#allocation2]] %s0
  $region1: #{tpu_custom_call.1} parent=0
    #allocation3 [shape = 'u8[8192]{0}', space=vmem, size = 0x2000, scoped, tag = 'input window, operand 1, single buffered']
    #allocation4 [shape = 's32[1]{0}', space=sflag, size = 0x4, scoped, tag = 'scoped memory for tpu_custom_call.1']
    #allocation5 [shape = 's32[1]{0}', space=sflag, size = 0x4, scoped, tag = 'scoped memory for tpu_custom_call.1']
    #allocation6 [shape = 'u8[8192]{0}', space=vmem, size = 0x2000, scoped, tag = 'input window, operand 2, single buffered']
    #allocation7 [shape = 's32[1]{0}', space=sflag, size = 0x4, scoped, tag = 'scoped memory for tpu_custom_call.1']
    #allocation8 [shape = 'u8[8192]{0}', space=vmem, size = 0x2000, scoped, tag = 'output window, operand 0, single buffered']
    %9 = vsyncpa [#allocation4], 0
    %10 = vsyncpa [#allocation7], 0
    %11 = vsyncpa [#allocation5], 0
    // Predicated region
    $region2: #{tpu_custom_call.1} parent=1 // pred_check
      _
    $region3: #{tpu_custom_call.1} parent=1 // pred_check_branch
      %13 = sbr.rel (0) target = $region5
    $region4: #{tpu_custom_call.1} parent=1 // pred_region
      _
    $region5: #{tpu_custom_call.1} parent=1 // pred_fallthru
      _
    // Predicated region
    $region6: #{tpu_custom_call.1} parent=1 // pred_check
      _
    $region7: #{tpu_custom_call.1} parent=1 // pred_check_branch
      %15 = sbr.rel (0) target = $region9
    $region8: #{tpu_custom_call.1} parent=1 // pred_region
      %17 = vsyncadd [#allocation4], 0
      %s19 = sshll.u32 %s1, 4
      %s20 = int_to_ptr.hbm [resolvable:$true] %s19
      %s21 = sshll.u32 [#allocation3], 4
      %s22 = int_to_ptr.vmem [resolvable:$true] %s21
      %24 = dma.hbm_to_vmem [thread:$0]  %s20, 256, %s22, [#allocation4]
    $region9: #{tpu_custom_call.1} parent=1 // pred_fallthru
      _
    // Predicated region
    $region10: #{tpu_custom_call.1} parent=1 // pred_check
      _
    $region11: #{tpu_custom_call.1} parent=1 // pred_check_branch
      %26 = sbr.rel (0) target = $region13
    $region12: #{tpu_custom_call.1} parent=1 // pred_region
      %28 = vsyncadd [#allocation7], 0
      %s30 = sshll.u32 %s2, 4
      %s31 = int_to_ptr.hbm [resolvable:$true] %s30
      %s32 = sshll.u32 [#allocation6], 4
      %s33 = int_to_ptr.vmem [resolvable:$true] %s32
      %35 = dma.hbm_to_vmem [thread:$0]  %s31, 256, %s33, [#allocation7]
    $region13: #{tpu_custom_call.1} parent=1 // pred_fallthru
      _
    // Predicated region
    $region14: #{tpu_custom_call.1} parent=1 // pred_check
      _
    $region15: #{tpu_custom_call.1} parent=1 // pred_check_branch
      %37 = sbr.rel (0) target = $region17
    $region16: #{tpu_custom_call.1} parent=1 // pred_region
      %39 = dma.done [#allocation4], 256
    $region17: #{tpu_custom_call.1} parent=1 // pred_fallthru
      _
    // Predicated region
    $region18: #{tpu_custom_call.1} parent=1 // pred_check
      _
    $region19: #{tpu_custom_call.1} parent=1 // pred_check_branch
      %41 = sbr.rel (0) target = $region21
    $region20: #{tpu_custom_call.1} parent=1 // pred_region
      %43 = dma.done [#allocation7], 256
    $region21: #{tpu_custom_call.1} parent=1 // pred_fallthru
      _
    %s44 = sld [smem:[#allocation2]]
    %v45 = vld [vmem:[#allocation3] sm:$0xff]
    %v46 = vld [vmem:[#allocation3 + $0x8] sm:$0xff]
    %v47 = vld [vmem:[#allocation6] sm:$0xff]
    %v48 = vld [vmem:[#allocation6 + $0x8] sm:$0xff]
    %v49 = vsub.f32 %v45, %v47
    %v50 = vsub.f32 %v46, %v48
    %v51 = vstv %s44
    %v52 = vmul.f32 %v51, %v49
    %v53 = vmul.f32 %v51, %v50
    %54 = vst [vmem:[#allocation8] sm:$0xff] %v52
    %55 = vst [vmem:[#allocation8 + $0x8] sm:$0xff] %v53
    // Predicated region
    $region22: #{tpu_custom_call.1} parent=1 // pred_check
      _
    $region23: #{tpu_custom_call.1} parent=1 // pred_check_branch
      %57 = sbr.rel (0) target = $region25
    $region24: #{tpu_custom_call.1} parent=1 // pred_region
      %59 = vsyncadd [#allocation5], 0
      %s61 = sshll.u32 [#allocation8], 4
      %s62 = int_to_ptr.vmem [resolvable:$true] %s61
      %s63 = sshll.u32 %s3, 4
      %s64 = int_to_ptr.hbm [resolvable:$true] %s63
      %66 = dma.vmem_to_hbm [thread:$0]  %s62, 256, %s64, [#allocation5]
    $region25: #{tpu_custom_call.1} parent=1 // pred_fallthru
      _
    // Predicated region
    $region26: #{tpu_custom_call.1} parent=1 // pred_check
      _
    $region27: #{tpu_custom_call.1} parent=1 // pred_check_branch
      %68 = sbr.rel (0) target = $region29
    $region28: #{tpu_custom_call.1} parent=1 // pred_region
      %70 = dma.done [#allocation5], 256
    $region29: #{tpu_custom_call.1} parent=1 // pred_fallthru
      _
    %71 = vsyncpa [#allocation4], 1
    %72 = vsyncpa [#allocation7], 1
    %73 = vsyncpa [#allocation5], 1

</llo_original>
